<compile_context>
chip_gen: v6e
topology: v6e:2x2x1
jax: 0.10.0
libtpu: 0.0.40
codegen_flags: <defaults>
</compile_context>

<pallas_src>
import jax
import jax.numpy as jnp
from jax.experimental import pallas as pl
from jax.experimental.pallas import tpu as pltpu


def _detect_head_kernel(scale_ref, x_ref, w_ref, b_ref, o_ref):
    """One (image, HW-tile) step of the detect head, channels-first.

    x_ref:     (ch, T)   channels-first pixels of one HW tile
    w_ref:     (no, ch)  pointwise-conv (detect head) weight, pre-transposed
    b_ref:     (no, 1)   detect head bias
    scale_ref: (no, 1)   [w, h, w, h, 1, 1, ...] box denormalization
    o_ref:     (no, T)   predictions (channels-first, lane-dense)
    """
    x = x_ref[...].astype(jnp.float32)            # (ch, T)
    wt = w_ref[...]                               # (no, ch)
    ch = x.shape[0]

    if ch <= 8:
        # Tiny contraction dim: unrolled VPU FMA (outer-product accumulate).
        # The MXU would be <2% utilized here and the kernel is HBM-bound anyway.
        acc = b_ref[...] + wt[:, 0:1] * x[0:1, :]                  # (no, T)
        for k in range(1, ch):
            acc = acc + wt[:, k:k + 1] * x[k:k + 1, :]
    else:
        # Realistic channel counts: use the MXU.
        acc = jnp.dot(wt, x, preferred_element_type=jnp.float32) + b_ref[...]

    # sigmoid(acc) = 1 / (1 + exp(-acc)); exp and the approximate reciprocal
    # both execute on the otherwise-idle EUP slot.
    y = pl.reciprocal(1.0 + jnp.exp(-acc), approx=True)

    # Box denormalization: rows 0..3 scaled by [w, h, w, h], rest by 1.
    o_ref[...] = (y * scale_ref[...]).astype(o_ref.dtype)


def detect_multibackend_forward(im, weight, bias, val=False,
                                tile_hw=None, stream_dtype=jnp.float32):
    """Forward of DetectMultiBackend (TF/TFLite-style branch, float path).

    im:     (b, ch, h, w) float32, NCHW (PyTorch convention)
    weight: (ch, no) float32 — synthetic detect-head weight (no = 5 + nc)
    bias:   (no,)    float32
    tile_hw: HW tile size (auto if None; rounded to a multiple of 128 lanes).
    stream_dtype: dtype of the streamed activations (bfloat16 halves HBM
        traffic on v6e/v7x; compute stays float32, which is also required on
        v5e where the VPU/EUP have no bf16 datapath).
    returns (b, h*w, no) predictions; boxes (cols 0..3) scaled to pixel coords.
    """
    b, ch, h, w = im.shape
    no = weight.shape[1]
    hw = h * w

    # ---- HW tiling (lane dimension). Tile must be a multiple of 128 lanes or
    # cover the full HW extent; HW is zero-padded so the remainder tile is
    # well-defined (padding is sliced off the output below). -------------------
    if tile_hw is None:
        # Mem-bound sweet spot; double-buffered (ch+no)*TILE_HW*4 bytes is tiny
        # vs the 32 MiB default scoped VMEM on every generation (incl. v7x).
        tile_hw = 1024
    if tile_hw >= hw:
        tile_hw = hw
    else:
        tile_hw = max(128, (tile_hw // 128) * 128)
        if tile_hw >= hw:
            tile_hw = hw
    hw_pad = pl.cdiv(hw, tile_hw) * tile_hw
    n_tiles = hw_pad // tile_hw

    # Free reshape: NCHW is already channels-first -> no HBM transpose pass.
    x = im.reshape(b, ch, hw).astype(stream_dtype)
    if hw_pad != hw:
        x = jnp.pad(x, ((0, 0), (0, 0), (0, hw_pad - hw)))

    # Tiny one-time parameter prep (done once by XLA; a real model would store
    # the detect-head weight pre-transposed).
    w_t = jnp.asarray(weight, jnp.float32).T                         # (no, ch)
    bias_c = jnp.asarray(bias, jnp.float32).reshape(no, 1)           # (no, 1)
    scale = jnp.concatenate(
        [jnp.array([w, h, w, h], dtype=jnp.float32),
         jnp.ones((no - 4,), dtype=jnp.float32)]).reshape(no, 1)     # (no, 1)

    y_cf = pl.pallas_call(
        _detect_head_kernel,
        out_shape=jax.ShapeDtypeStruct((b, no, hw_pad), jnp.float32),
        grid_spec=pltpu.PrefetchScalarGridSpec(
            num_scalar_prefetch=0,
            grid=(b, n_tiles),
            in_specs=[
                pl.BlockSpec((no, 1), lambda i, j: (0, 0)),            # scale (resident)
                pl.BlockSpec((None, ch, tile_hw), lambda i, j: (i, 0, j)),  # x tile
                pl.BlockSpec((no, ch), lambda i, j: (0, 0)),           # weight (resident)
                pl.BlockSpec((no, 1), lambda i, j: (0, 0)),            # bias (resident)
            ],
            out_specs=pl.BlockSpec((None, no, tile_hw), lambda i, j: (i, 0, j)),
        ),
        compiler_params=pltpu.CompilerParams(
            dimension_semantics=("parallel", "parallel")),
    )(scale, x, w_t, bias_c)

    # Strip HW padding; return the module's (b, n_pred, 5+nc) prediction
    # layout (layout glue outside the kernel; elide if consumer accepts CF).
    y = jnp.transpose(y_cf[:, :, :hw], (0, 2, 1))

    # return (y, []) if val else y — matches module semantics.
    return (y, []) if val else y


def _reference(im, weight, bias):
    """Plain-JAX reference for correctness checking."""
    b, ch, h, w = im.shape
    no = weight.shape[1]
    x = jnp.transpose(im, (0, 2, 3, 1)).reshape(b, h * w, ch)
    y = jax.nn.sigmoid(x @ weight + bias[None, None, :])
    scale = jnp.concatenate(
        [jnp.array([w, h, w, h], dtype=jnp.float32),
         jnp.ones((no - 4,), dtype=jnp.float32)])
    return y * scale


if __name__ == "__main__":
    key = jax.random.PRNGKey(0)
    k_im, k_w, k_b = jax.random.split(key, 3)

    # Small shapes: batch=2, channels=4, spatial=16x16, nc=15 classes -> no=20.
    B, C, H, W = 2, 4, 16, 16
    NC = 15
    NO = 5 + NC

    im = jax.random.normal(k_im, (B, C, H, W), dtype=jnp.float32)
    weight = 0.1 * jax.random.normal(k_w, (C, NO), dtype=jnp.float32)
    bias = 0.01 * jax.random.normal(k_b, (NO,), dtype=jnp.float32)

    # tile_hw=128 exercises the tiled (batch, hw_tiles) grid at this small size.
    y = detect_multibackend_forward(im, weight, bias, val=False, tile_hw=128)
    y = jax.block_until_ready(y)

    y_ref = _reference(im, weight, bias)
    assert y.shape == (B, H * W, NO), y.shape
    # Tolerance loosened vs exact sigmoid: the in-kernel sigmoid uses the EUP
    # approximate reciprocal (pl.reciprocal(..., approx=True)).
    max_err = float(jnp.max(jnp.abs(y - y_ref)))
    assert jnp.allclose(y, y_ref, atol=2e-2, rtol=2e-3), f"mismatch, max_err={max_err}"

    # val=True path returns (y, []) like the module.
    y_val, aux = detect_multibackend_forward(im, weight, bias, val=True, tile_hw=128)
    jax.block_until_ready(y_val)
    assert aux == []
    assert jnp.allclose(y_val, y)

    print("KERNEL_OK")
</pallas_src>

<mosaic_0001>
module attributes {stable_mosaic.version = 11 : i64} {
  func.func @_detect_head_kernel(%arg0: i32, %arg1: i32, %arg2: memref<20x1xf32, #tpu.memory_space<vmem>>, %arg3: memref<1x4x128xf32, #tpu.memory_space<vmem>>, %arg4: memref<20x4xf32, #tpu.memory_space<vmem>>, %arg5: memref<20x1xf32, #tpu.memory_space<vmem>>, %arg6: memref<1x20x128xf32, #tpu.memory_space<vmem>>) attributes {dimension_semantics = [#tpu.dimension_semantics<parallel>, #tpu.dimension_semantics<parallel>], iteration_bounds = array<i64: 2, 2>, scalar_prefetch = 0 : i64, scratch_operands = 0 : i64, tpu.core_type = #tpu.core_type<tc>, window_params = [{pipeline_mode = #tpu.pipeline_mode<synchronous>, transform_indices = @transform_0, window_bounds = array<i64: 20, 1>}, {transform_indices = @transform_1, window_bounds = array<i64: 1, 4, 128>}, {pipeline_mode = #tpu.pipeline_mode<synchronous>, transform_indices = @transform_2, window_bounds = array<i64: 20, 4>}, {pipeline_mode = #tpu.pipeline_mode<synchronous>, transform_indices = @transform_3, window_bounds = array<i64: 20, 1>}, {transform_indices = @transform_4, window_bounds = array<i64: 1, 20, 128>}]} {
    %c0 = arith.constant 0 : index
    %c0_0 = arith.constant 0 : index
    %c0_1 = arith.constant 0 : index
    %0 = vector.load %arg3[%c0, %c0_0, %c0_1] : memref<1x4x128xf32, #tpu.memory_space<vmem>>, vector<1x4x128xf32>
    %1 = vector.shape_cast %0 : vector<1x4x128xf32> to vector<4x128xf32>
    %c0_2 = arith.constant 0 : index
    %c0_3 = arith.constant 0 : index
    %2 = vector.load %arg4[%c0_2, %c0_3] : memref<20x4xf32, #tpu.memory_space<vmem>>, vector<20x4xf32>
    %c0_4 = arith.constant 0 : index
    %c0_5 = arith.constant 0 : index
    %3 = vector.load %arg5[%c0_4, %c0_5] : memref<20x1xf32, #tpu.memory_space<vmem>>, vector<20x1xf32>
    %4 = vector.extract_strided_slice %2 {offsets = [0, 0], sizes = [20, 1], strides = [1, 1]} : vector<20x4xf32> to vector<20x1xf32>
    %5 = vector.extract_strided_slice %1 {offsets = [0, 0], sizes = [1, 128], strides = [1, 1]} : vector<4x128xf32> to vector<1x128xf32>
    %6 = vector.broadcast %4 : vector<20x1xf32> to vector<20x128xf32>
    %7 = vector.broadcast %5 : vector<1x128xf32> to vector<20x128xf32>
    %8 = arith.mulf %6, %7 : vector<20x128xf32>
    %9 = vector.broadcast %3 : vector<20x1xf32> to vector<20x128xf32>
    %10 = arith.addf %9, %8 : vector<20x128xf32>
    %11 = vector.extract_strided_slice %2 {offsets = [0, 1], sizes = [20, 1], strides = [1, 1]} : vector<20x4xf32> to vector<20x1xf32>
    %12 = vector.extract_strided_slice %1 {offsets = [1, 0], sizes = [1, 128], strides = [1, 1]} : vector<4x128xf32> to vector<1x128xf32>
    %13 = vector.broadcast %11 : vector<20x1xf32> to vector<20x128xf32>
    %14 = vector.broadcast %12 : vector<1x128xf32> to vector<20x128xf32>
    %15 = arith.mulf %13, %14 : vector<20x128xf32>
    %16 = arith.addf %10, %15 : vector<20x128xf32>
    %17 = vector.extract_strided_slice %2 {offsets = [0, 2], sizes = [20, 1], strides = [1, 1]} : vector<20x4xf32> to vector<20x1xf32>
    %18 = vector.extract_strided_slice %1 {offsets = [2, 0], sizes = [1, 128], strides = [1, 1]} : vector<4x128xf32> to vector<1x128xf32>
    %19 = vector.broadcast %17 : vector<20x1xf32> to vector<20x128xf32>
    %20 = vector.broadcast %18 : vector<1x128xf32> to vector<20x128xf32>
    %21 = arith.mulf %19, %20 : vector<20x128xf32>
    %22 = arith.addf %16, %21 : vector<20x128xf32>
    %23 = vector.extract_strided_slice %2 {offsets = [0, 3], sizes = [20, 1], strides = [1, 1]} : vector<20x4xf32> to vector<20x1xf32>
    %24 = vector.extract_strided_slice %1 {offsets = [3, 0], sizes = [1, 128], strides = [1, 1]} : vector<4x128xf32> to vector<1x128xf32>
    %25 = vector.broadcast %23 : vector<20x1xf32> to vector<20x128xf32>
    %26 = vector.broadcast %24 : vector<1x128xf32> to vector<20x128xf32>
    %27 = arith.mulf %25, %26 : vector<20x128xf32>
    %28 = arith.addf %22, %27 : vector<20x128xf32>
    %cst = arith.constant 0.000000e+00 : f32
    %29 = vector.broadcast %cst : f32 to vector<20x128xf32>
    %30 = arith.subf %29, %28 : vector<20x128xf32>
    %31 = math.exp %30 : vector<20x128xf32>
    %cst_6 = arith.constant 1.000000e+00 : f32
    %32 = vector.broadcast %cst_6 : f32 to vector<20x128xf32>
    %33 = arith.addf %32, %31 : vector<20x128xf32>
    %34 = tpu.reciprocal %33 {approx = true} : vector<20x128xf32> -> vector<20x128xf32>
    %c0_7 = arith.constant 0 : index
    %c0_8 = arith.constant 0 : index
    %35 = vector.load %arg2[%c0_7, %c0_8] : memref<20x1xf32, #tpu.memory_space<vmem>>, vector<20x1xf32>
    %36 = vector.broadcast %35 : vector<20x1xf32> to vector<20x128xf32>
    %37 = arith.mulf %34, %36 : vector<20x128xf32>
    %c0_9 = arith.constant 0 : index
    %c0_10 = arith.constant 0 : index
    %c0_11 = arith.constant 0 : index
    %38 = vector.load %arg6[%c0_9, %c0_10, %c0_11] : memref<1x20x128xf32, #tpu.memory_space<vmem>>, vector<1x20x128xf32>
    %39 = vector.shape_cast %38 : vector<1x20x128xf32> to vector<20x128xf32>
    %40 = vector.shape_cast %37 : vector<20x128xf32> to vector<1x20x128xf32>
    tpu.vector_store %arg6[%c0_9, %c0_10, %c0_11], %40 {strides = array<i32>} : memref<1x20x128xf32, #tpu.memory_space<vmem>>, vector<1x20x128xf32>,
    return
  }
  func.func @transform_0(%arg0: i32, %arg1: i32) -> (i32, i32) {
    %c0_i32 = arith.constant 0 : i32
    %c0_i32_0 = arith.constant 0 : i32
    %c0_i32_1 = arith.constant 0 : i32
    return %c0_i32, %c0_i32_0 : i32, i32
  }
  func.func @transform_1(%arg0: i32, %arg1: i32) -> (i32, i32, i32) {
    %c0_i32 = arith.constant 0 : i32
    %c0_i32_0 = arith.constant 0 : i32
    return %arg0, %c0_i32, %arg1 : i32, i32, i32
  }
  func.func @transform_2(%arg0: i32, %arg1: i32) -> (i32, i32) {
    %c0_i32 = arith.constant 0 : i32
    %c0_i32_0 = arith.constant 0 : i32
    %c0_i32_1 = arith.constant 0 : i32
    return %c0_i32, %c0_i32_0 : i32, i32
  }
  func.func @transform_3(%arg0: i32, %arg1: i32) -> (i32, i32) {
    %c0_i32 = arith.constant 0 : i32
    %c0_i32_0 = arith.constant 0 : i32
    %c0_i32_1 = arith.constant 0 : i32
    return %c0_i32, %c0_i32_0 : i32, i32
  }
  func.func @transform_4(%arg0: i32, %arg1: i32) -> (i32, i32, i32) {
    %c0_i32 = arith.constant 0 : i32
    %c0_i32_0 = arith.constant 0 : i32
    return %arg0, %c0_i32, %arg1 : i32, i32, i32
  }
}

</mosaic_0001>

<llo_original>
// kernel: tpu_custom_call.1
$region0: #{tpu_custom_call.1}
  #allocation0 [shape = 'u32[]', space=smem, size = 0x4, offset = 0x4, fixed_abs, tag = 'smem constant byte address 0x4 - core index']
  #allocation1 [shape = 'u32[144,128]{1,0:T(1,128)}', space=vmem, size = 0x12000, scoped, tag = 'internal scratch']
  %s0 = inlined_call_operand.vmem [shape: f32[20,1], index: 0, kind: input, shape index: {}]
  %s1 = inlined_call_operand.vmem [shape: f32[2,4,256], index: 1, kind: input, shape index: {}]
  %s2 = inlined_call_operand.vmem [shape: f32[20,4], index: 2, kind: input, shape index: {}]
  %s3 = inlined_call_operand.vmem [shape: f32[20,1], index: 3, kind: input, shape index: {}]
  %s4 = inlined_call_operand.vmem [shape: f32[2,20,256], index: 4, kind: output, shape index: {}]
  %s5 = sld [smem:[#allocation0]]
  $region83: #{tpu_custom_call.1} parent=0
    _
  %s7 = ssub.s32 1, %s5
  %s8 = scalar_select 0, %s7, %s5
  $region1: #{tpu_custom_call.1} parent=0
    #allocation2 [shape = 'u8[24576]{0}', space=vmem, size = 0x6000, scoped, tag = 'output window, operand 0']
    loop: start=0, step=1, limit=6
    $region2: #{tpu_custom_call.1} parent=1 // loop_pre_header
      _
    $region3: #{tpu_custom_call.1} parent=1 // loop_header
      %s10 = sphi 0, %s14
      %p11 = scmp.ge.s32.totalorder %s10, 6
      %s17 = sphi 0, %s29
      %s18 = sphi 0, %s25
      %s19 = sphi 0, %s17
      %s20 = sphi 0, %s18
      %s21 = sphi 0, %s19
      %s22 = sphi 0, %s20
      %s30 = sphi 0, %s30
      %s32 = sphi 0, %s30
      %s33 = sphi 0, %s32
      %s47 = sphi 0, %s33
      %s55 = sphi 0, %s57
      %s58 = sphi 0, %s55
      %s59 = sphi 0, %s58
      %s75 = sphi 0, %s59
      %s79 = sphi 0, %s79
      %s81 = sphi 0, %s79
      %s82 = sphi 0, %s81
      %s96 = sphi 0, %s82
      %s100 = sphi 0, %s100
      %s102 = sphi 0, %s100
      %s103 = sphi 0, %s102
      %s117 = sphi 0, %s103
      %s125 = sphi 0, %s127
      %s128 = sphi 0, %s125
      %s129 = sphi 0, %s128
      %s145 = sphi 0, %s129
    $region4: #{tpu_custom_call.1} parent=1 // loop_header_branch
      %13 = sbr.rel (%p11) target = $region8
    $region5: #{tpu_custom_call.1} parent=1 // loop_body
      %s15 = ssub.s32 %s10, 1
      %s16 = ssub.s32 %s10, 2
      %s23 = sadd.s32 1, %s18
      %p24 = scmp.ge.s32.totalorder %s23, 2
      %s25 = scalar_select %p24, 0, %s23
      %s26 = sadd.s32 1, %s17
      %s27 = scalar_select %p24, %s26, %s17
      %p28 = scmp.ge.s32.totalorder %s27, 2
      %s29 = scalar_select %p28, 0, %s27
      %s31 = sadd.s32 %s30, 1
      %p34 = scmp.eq.s32.totalorder %s10, 3
      %p35 = scmp.ne.s32.totalorder %s30, %s32
      %p36 = scmp.eq.s32.totalorder %s10, 0
      %p37 = por %p35, %p36
      %p38 = scmp.ne.s32.totalorder %s30, %s32
      %p39 = scmp.eq.s32.totalorder %s15, 3
      %p40 = por %p38, %p39
      %p41 = scmp.ne.s32.totalorder %s32, %s33
      %p42 = scmp.eq.s32.totalorder %s15, 0
      %p43 = por %p41, %p42
      %p44 = scmp.ne.s32.totalorder %s32, %s33
      %p45 = scmp.eq.s32.totalorder %s16, 3
      %p46 = por %p44, %p45
      %p48 = scmp.ne.s32.totalorder %s33, %s47
      %p49 = scmp.eq.s32.totalorder %s16, 0
      %p50 = por %p48, %p49
      %s51 = ssub.s32 %s17, %s29
      %s52 = ssub.s32 %s18, %s25
      %s53 = sor.u32 %s51, %s52
      %p54 = scmp.eq.s32.totalorder %s53, 0
      %s56 = sadd.s32 %s55, 1
      %s57 = scalar_select %p54, %s55, %s56
      %p60 = pneg %p54
      %p61 = scmp.eq.s32.totalorder %s10, 3
      %p62 = por %p60, %p61
      %p63 = scmp.ne.s32.totalorder %s55, %s58
      %p64 = scmp.eq.s32.totalorder %s10, 0
      %p65 = por %p63, %p64
      %p66 = scmp.ne.s32.totalorder %s55, %s58
      %p67 = scmp.eq.s32.totalorder %s15, 3
      %p68 = por %p66, %p67
      %p69 = scmp.ne.s32.totalorder %s58, %s59
      %p70 = scmp.eq.s32.totalorder %s15, 0
      %p71 = por %p69, %p70
      %p72 = scmp.ne.s32.totalorder %s58, %s59
      %p73 = scmp.eq.s32.totalorder %s16, 3
      %p74 = por %p72, %p73
      %p76 = scmp.ne.s32.totalorder %s59, %s75
      %p77 = scmp.eq.s32.totalorder %s16, 0
      %p78 = por %p76, %p77
      %s80 = sadd.s32 %s79, 1
      %p83 = scmp.eq.s32.totalorder %s10, 3
      %p84 = scmp.ne.s32.totalorder %s79, %s81
      %p85 = scmp.eq.s32.totalorder %s10, 0
      %p86 = por %p84, %p85
      %p87 = scmp.ne.s32.totalorder %s79, %s81
      %p88 = scmp.eq.s32.totalorder %s15, 3
      %p89 = por %p87, %p88
      %p90 = scmp.ne.s32.totalorder %s81, %s82
      %p91 = scmp.eq.s32.totalorder %s15, 0
      %p92 = por %p90, %p91
      %p93 = scmp.ne.s32.totalorder %s81, %s82
      %p94 = scmp.eq.s32.totalorder %s16, 3
      %p95 = por %p93, %p94
      %p97 = scmp.ne.s32.totalorder %s82, %s96
      %p98 = scmp.eq.s32.totalorder %s16, 0
      %p99 = por %p97, %p98
      %s101 = sadd.s32 %s100, 1
      %p104 = scmp.eq.s32.totalorder %s10, 3
      %p105 = scmp.ne.s32.totalorder %s100, %s102
      %p106 = scmp.eq.s32.totalorder %s10, 0
      %p107 = por %p105, %p106
      %p108 = scmp.ne.s32.totalorder %s100, %s102
      %p109 = scmp.eq.s32.totalorder %s15, 3
      %p110 = por %p108, %p109
      %p111 = scmp.ne.s32.totalorder %s102, %s103
      %p112 = scmp.eq.s32.totalorder %s15, 0
      %p113 = por %p111, %p112
      %p114 = scmp.ne.s32.totalorder %s102, %s103
      %p115 = scmp.eq.s32.totalorder %s16, 3
      %p116 = por %p114, %p115
      %p118 = scmp.ne.s32.totalorder %s103, %s117
      %p119 = scmp.eq.s32.totalorder %s16, 0
      %p120 = por %p118, %p119
      %s121 = ssub.s32 %s17, %s29
      %s122 = ssub.s32 %s18, %s25
      %s123 = sor.u32 %s121, %s122
      %p124 = scmp.eq.s32.totalorder %s123, 0
      %s126 = sadd.s32 %s125, 1
      %s127 = scalar_select %p124, %s125, %s126
      %p130 = pneg %p124
      %p131 = scmp.eq.s32.totalorder %s10, 3
      %p132 = por %p130, %p131
      %p133 = scmp.ne.s32.totalorder %s125, %s128
      %p134 = scmp.eq.s32.totalorder %s10, 0
      %p135 = por %p133, %p134
      %p136 = scmp.ne.s32.totalorder %s125, %s128
      %p137 = scmp.eq.s32.totalorder %s15, 3
      %p138 = por %p136, %p137
      %p139 = scmp.ne.s32.totalorder %s128, %s129
      %p140 = scmp.eq.s32.totalorder %s15, 0
      %p141 = por %p139, %p140
      %p142 = scmp.ne.s32.totalorder %s128, %s129
      %p143 = scmp.eq.s32.totalorder %s16, 3
      %p144 = por %p142, %p143
      %p146 = scmp.ne.s32.totalorder %s129, %s145
      %p147 = scmp.eq.s32.totalorder %s16, 0
      %p148 = por %p146, %p147
      %p149 = scmp.le.s32.totalorder 1, %s10
      %p150 = scmp.lt.s32.totalorder %s10, 5
      %p151 = pnand %p149, %p150
      %p152 = pneg %p151
      // Predicated region
      $region9: #{tpu_custom_call.1} parent=5 // pred_check
        _
      $region10: #{tpu_custom_call.1} parent=5 // pred_check_branch
        %154 = sbr.rel (%p151) target = $region12
      $region11: #{tpu_custom_call.1} parent=5 // pred_region
        %s155 = ssub.s32 %s10, 1
        // Predicated region
        $region13: #{tpu_custom_call.1} parent=11 // pred_check
          %p156 = pneg %p43
        $region14: #{tpu_custom_call.1} parent=11 // pred_check_branch
          %158 = sbr.rel (%p156) target = $region16
        $region15: #{tpu_custom_call.1} parent=11 // pred_region
          _
        $region16: #{tpu_custom_call.1} parent=11 // pred_fallthru
          _
        // Predicated region
        $region17: #{tpu_custom_call.1} parent=11 // pred_check
          %p159 = pneg %p92
        $region18: #{tpu_custom_call.1} parent=11 // pred_check_branch
          %161 = sbr.rel (%p159) target = $region20
        $region19: #{tpu_custom_call.1} parent=11 // pred_region
          _
        $region20: #{tpu_custom_call.1} parent=11 // pred_fallthru
          _
        // Predicated region
        $region21: #{tpu_custom_call.1} parent=11 // pred_check
          %p162 = pneg %p113
        $region22: #{tpu_custom_call.1} parent=11 // pred_check_branch
          %164 = sbr.rel (%p162) target = $region24
        $region23: #{tpu_custom_call.1} parent=11 // pred_region
          _
        $region24: #{tpu_custom_call.1} parent=11 // pred_fallthru
          _
      $region12: #{tpu_custom_call.1} parent=5 // pred_fallthru
        _
      %p165 = scmp.lt.s32.totalorder %s10, 4
      // Predicated region
      $region25: #{tpu_custom_call.1} parent=5 // pred_check
        %p166 = pneg %p165
      $region26: #{tpu_custom_call.1} parent=5 // pred_check_branch
        %168 = sbr.rel (%p166) target = $region28
      $region27: #{tpu_custom_call.1} parent=5 // pred_region
        // Predicated region
        $region29: #{tpu_custom_call.1} parent=27 // pred_check
          %p169 = pneg %p65
        $region30: #{tpu_custom_call.1} parent=27 // pred_check_branch
          %171 = sbr.rel (%p169) target = $region32
        $region31: #{tpu_custom_call.1} parent=27 // pred_region
          %p172 = scmp.lt.s32.totalorder %s17, 1
          %s173 = scalar_select %p172, %s17, 1
          %p174 = scmp.lt.s32.totalorder %s18, 1
          %s175 = scalar_select %p174, %s18, 1
          %s176 = smul.addr %s173, 2
          %s177 = sadd.s32 %s175, %s176
          %s178 = smul.addr %s177, 4
          %s179 = scalar_lea.vmem %s1, %s178
        $region32: #{tpu_custom_call.1} parent=27 // pred_fallthru
          _
      $region28: #{tpu_custom_call.1} parent=5 // pred_fallthru
        _
      %p180 = scmp.le.s32.totalorder 1, %s10
      %p181 = scmp.lt.s32.totalorder %s10, 5
      %p182 = pnand %p180, %p181
      %p183 = pneg %p182
      // Predicated region
      $region33: #{tpu_custom_call.1} parent=5 // pred_check
        _
      $region34: #{tpu_custom_call.1} parent=5 // pred_check_branch
        %185 = sbr.rel (%p182) target = $region36
      $region35: #{tpu_custom_call.1} parent=5 // pred_region
        %s186 = ssub.s32 %s10, 1
        %p187 = pneg %p43
        %p188 = pneg %p40
        %p189 = scmp.lt.s32.totalorder %s19, 1
        %s190 = scalar_select %p189, %s19, 1
        %p191 = scmp.lt.s32.totalorder %s20, 1
        %s192 = scalar_select %p191, %s20, 1
        %s193 = smul.addr %s190, 2
        %s194 = sadd.s32 %s192, %s193
        %s195 = smul.addr %s194, 4
        %s196 = scalar_lea.vmem %s1, %s195
        %p197 = pneg %p71
        %p198 = pneg %p68
        %p199 = pneg %p92
        %p200 = pneg %p89
        %p201 = pneg %p113
        %p202 = pneg %p110
        %p203 = pneg %p141
        %p204 = pneg %p138
        %s205 = sand.u32 %s128, 1
        %s206 = sand.u32 %s128, 1
        %s207 = smul.addr %s206, 24
        %s208 = scalar_lea.vmem [#allocation2], %s207
        %p209 = scmp.lt.s32.totalorder %s19, 1
        %s210 = scalar_select %p209, %s19, 1
        %p211 = scmp.lt.s32.totalorder %s20, 1
        %s212 = scalar_select %p211, %s20, 1
        %s213 = smul.addr %s210, 2
        %s214 = sadd.s32 %s212, %s213
        %s215 = smul.addr %s214, 4
        %s216 = scalar_lea.vmem %s1, %s215
        %v217 = vld [vmem:[%s216] sm:$0xf]
        %v218 = vld [vmem:[%s2] sm:$0xff]
        %v219 = vld [vmem:[%s2 + $0x8] sm:$0xff]
        %v220 = vld [vmem:[%s2 + $0x10] sm:$0xf]
        %v221 = vld [vmem:[%s3] sm:$0xff]
        %v222 = vld [vmem:[%s3 + $0x8] sm:$0xff]
        %v223 = vld [vmem:[%s3 + $0x10] sm:$0xf]
        %225 = vset.pattern.permute.xlu0 0
        %226 = vperm.xlu0 %225, %v218
        %v227 = vpop.permute.xlu0 %226
        %230 = vset.pattern.permute.xlu0 0
        %231 = vperm.xlu0 %230, %v219
        %v232 = vpop.permute.xlu0 %231
        %235 = vset.pattern.permute.xlu0 0
        %236 = vperm.xlu0 %235, %v220
        %v237 = vpop.permute.xlu0 %236
        %v239 = vlaneseq
        %v240 = vshrl.u32 %v239, 7
        %v241 = vsub.s32 0, %v240
        %v242 = vrot.slane %v217, %v241
        %v243 = vmul.f32 %v227, %v242
        %v244 = vmul.f32 %v232, %v242
        %v245 = vmul.f32 %v237, %v242
        %247 = vset.pattern.permute.xlu0 0
        %248 = vperm.xlu0 %247, %v221
        %v249 = vpop.permute.xlu0 %248
        %252 = vset.pattern.permute.xlu0 0
        %253 = vperm.xlu0 %252, %v222
        %v254 = vpop.permute.xlu0 %253
        %257 = vset.pattern.permute.xlu0 0
        %258 = vperm.xlu0 %257, %v223
        %v259 = vpop.permute.xlu0 %258
        %v261 = vadd.f32 %v249, %v243
        %v262 = vadd.f32 %v254, %v244
        %v263 = vadd.f32 %v259, %v245
        %264 = vset.pattern.permute.xlu0 1
        %265 = vperm.xlu0 %264, %v218
        %v266 = vpop.permute.xlu0 %265
        %268 = vset.pattern.permute.xlu0 1
        %269 = vperm.xlu0 %268, %v219
        %v270 = vpop.permute.xlu0 %269
        %272 = vset.pattern.permute.xlu0 1
        %273 = vperm.xlu0 %272, %v220
        %v274 = vpop.permute.xlu0 %273
        %v276 = vlaneseq
        %v277 = vshrl.u32 %v276, 7
        %v278 = vsub.s32 1, %v277
        %v279 = vrot.slane %v217, %v278
        %v280 = vmul.f32 %v266, %v279
        %v281 = vmul.f32 %v270, %v279
        %v282 = vmul.f32 %v274, %v279
        %v283 = vadd.f32 %v261, %v280
        %v284 = vadd.f32 %v262, %v281
        %v285 = vadd.f32 %v263, %v282
        %286 = vset.pattern.permute.xlu0 2
        %287 = vperm.xlu0 %286, %v218
        %v288 = vpop.permute.xlu0 %287
        %290 = vset.pattern.permute.xlu0 2
        %291 = vperm.xlu0 %290, %v219
        %v292 = vpop.permute.xlu0 %291
        %294 = vset.pattern.permute.xlu0 2
        %295 = vperm.xlu0 %294, %v220
        %v296 = vpop.permute.xlu0 %295
        %v298 = vlaneseq
        %v299 = vshrl.u32 %v298, 7
        %v300 = vsub.s32 2, %v299
        %v301 = vrot.slane %v217, %v300
        %v302 = vmul.f32 %v288, %v301
        %v303 = vmul.f32 %v292, %v301
        %v304 = vmul.f32 %v296, %v301
        %v305 = vadd.f32 %v283, %v302
        %v306 = vadd.f32 %v284, %v303
        %v307 = vadd.f32 %v285, %v304
        %308 = vset.pattern.permute.xlu0 3
        %309 = vperm.xlu0 %308, %v218
        %v310 = vpop.permute.xlu0 %309
        %312 = vset.pattern.permute.xlu0 3
        %313 = vperm.xlu0 %312, %v219
        %v314 = vpop.permute.xlu0 %313
        %316 = vset.pattern.permute.xlu0 3
        %317 = vperm.xlu0 %316, %v220
        %v318 = vpop.permute.xlu0 %317
        %v320 = vlaneseq
        %v321 = vshrl.u32 %v320, 7
        %v322 = vsub.s32 3, %v321
        %v323 = vrot.slane %v217, %v322
        %v324 = vmul.f32 %v310, %v323
        %v325 = vmul.f32 %v314, %v323
        %v326 = vmul.f32 %v318, %v323
        %v327 = vadd.f32 %v305, %v324
        %v328 = vadd.f32 %v306, %v325
        %v329 = vadd.f32 %v307, %v326
        %v330 = vsub.f32 0.0, %v327
        %v331 = vsub.f32 0.0, %v328
        %v332 = vsub.f32 0.0, %v329
        %v333 = vmul.f32 %v330, 1.442695
        %v334 = vpow.pop %v333
        %v335 = vmul.f32 %v331, 1.442695
        %v336 = vpow.pop %v335
        %v337 = vmul.f32 %v332, 1.442695
        %v338 = vpow.pop %v337
        %v339 = vadd.f32 %v334, 1.0
        %v340 = vadd.f32 %v336, 1.0
        %v341 = vadd.f32 %v338, 1.0
        %v342 = vrcp.pop %v339
        %v343 = vrcp.pop %v340
        %v344 = vrcp.pop %v341
        %v345 = vld [vmem:[%s0] sm:$0xff]
        %v346 = vld [vmem:[%s0 + $0x8] sm:$0xff]
        %v347 = vld [vmem:[%s0 + $0x10] sm:$0xf]
        %349 = vset.pattern.permute.xlu0 0
        %350 = vperm.xlu0 %349, %v345
        %v351 = vpop.permute.xlu0 %350
        %354 = vset.pattern.permute.xlu0 0
        %355 = vperm.xlu0 %354, %v346
        %v356 = vpop.permute.xlu0 %355
        %359 = vset.pattern.permute.xlu0 0
        %360 = vperm.xlu0 %359, %v347
        %v361 = vpop.permute.xlu0 %360
        %v363 = vmul.f32 %v342, %v351
        %v364 = vmul.f32 %v343, %v356
        %v365 = vmul.f32 %v344, %v361
        %366 = vst [vmem:[%s208] sm:$0xff] %v363
        %367 = vst [vmem:[%s208 + $0x8] sm:$0xff] %v364
        %368 = vst [vmem:[%s208 + $0x10] sm:$0xf] %v365
        %s369 = sand.u32 %s128, 1
        %s370 = sand.u32 %s128, 1
        %s371 = smul.addr %s370, 24
        %s372 = scalar_lea.vmem [#allocation2], %s371
        // Predicated region
        $region37: #{tpu_custom_call.1} parent=35 // pred_check
          %p373 = pneg %p138
        $region38: #{tpu_custom_call.1} parent=35 // pred_check_branch
          %375 = sbr.rel (%p373) target = $region40
        $region39: #{tpu_custom_call.1} parent=35 // pred_region
          %s376 = smul.addr %s19, 6
          %s377 = sadd.s32 %s20, %s376
          %s378 = smul.addr %s377, 8
          %s379 = scalar_lea.vmem %s4, %s378
          // Predicated region
          $region41: #{tpu_custom_call.1} parent=39 // pred_check
            _
          $region42: #{tpu_custom_call.1} parent=39 // pred_check_branch
            %381 = sbr.rel (0) target = $region44
          $region43: #{tpu_custom_call.1} parent=39 // pred_region
            // Predicated region
            $region45: #{tpu_custom_call.1} parent=43 // pred_check
              _
            $region46: #{tpu_custom_call.1} parent=43 // pred_check_branch
              %383 = sbr.rel (0) target = $region48
            $region47: #{tpu_custom_call.1} parent=43 // pred_region
              // Predicated region
              $region60: #{tpu_custom_call.1} parent=47 // pred_check
                _
              $region61: #{tpu_custom_call.1} parent=47 // pred_check_branch
                %403 = sbr.rel (0) target = $region63
              $region62: #{tpu_custom_call.1} parent=47 // pred_region
                loop: start=0, step=1, limit=1
                $region64: #{tpu_custom_call.1} parent=62 // loop_pre_header
                  _
                $region65: #{tpu_custom_call.1} parent=62 // loop_header
                  %s405 = sphi 0, %s409
                  %p406 = scmp.ge.s32.totalorder %s405, 1
                  %s410 = sphi %s372, %s372
                  %s411 = sphi %s379, %s379
                $region66: #{tpu_custom_call.1} parent=62 // loop_header_branch
                  %408 = sbr.rel (%p406) target = $region70
                $region67: #{tpu_custom_call.1} parent=62 // loop_body
                  %v412 = vld [vmem:[%s410] sm:$0xff]
                  %413 = vst [vmem:[%s411] sm:$0xff] %v412
                  %v414 = vld [vmem:[%s410 + $0x8] sm:$0xff]
                  %415 = vst [vmem:[%s411 + $0x10] sm:$0xff] %v414
                  %v416 = vld [vmem:[%s410 + $0x10] sm:$0xff]
                  %417 = vst [vmem:[%s411 + $0x20] sm:$0xff] %v416
                $region68: #{tpu_custom_call.1} parent=62 // loop_footer
                  %s409 = sadd.s32 1, %s405
                $region69: #{tpu_custom_call.1} parent=62 // loop_footer_branch
                  %404 = sbr.rel target = $region65
                $region70: #{tpu_custom_call.1} parent=62 // loop_exit
                  _
              $region63: #{tpu_custom_call.1} parent=47 // pred_fallthru
                _
              // Predicated region
              $region71: #{tpu_custom_call.1} parent=47 // pred_check
                _
              $region72: #{tpu_custom_call.1} parent=47 // pred_check_branch
                %419 = sbr.rel target = $region74
              $region73: #{tpu_custom_call.1} parent=47 // pred_region
                _
              $region74: #{tpu_custom_call.1} parent=47 // pred_fallthru
                _
            $region48: #{tpu_custom_call.1} parent=43 // pred_fallthru
              _
            // Predicated region
            $region49: #{tpu_custom_call.1} parent=43 // pred_check
              _
            $region50: #{tpu_custom_call.1} parent=43 // pred_check_branch
              %385 = sbr.rel target = $region52
            $region51: #{tpu_custom_call.1} parent=43 // pred_region
              %s387 = ssub.s32 256, 1
              loop: start=0, step=1, limit=1
              $region53: #{tpu_custom_call.1} parent=51 // loop_pre_header
                _
              $region54: #{tpu_custom_call.1} parent=51 // loop_header
                %s389 = sphi 0, %s393
                %p390 = scmp.ge.s32.totalorder %s389, 1
                %s394 = sphi %s372, %s372
                %s395 = sphi %s379, %s379
              $region55: #{tpu_custom_call.1} parent=51 // loop_header_branch
                %392 = sbr.rel (%p390) target = $region59
              $region56: #{tpu_custom_call.1} parent=51 // loop_body
                %v396 = vld [vmem:[%s394] sm:%s387]
                %397 = vst [vmem:[%s395] sm:%s387] %v396
                %v398 = vld [vmem:[%s394 + $0x8] sm:%s387]
                %399 = vst [vmem:[%s395 + $0x10] sm:%s387] %v398
                %v400 = vld [vmem:[%s394 + $0x10] sm:%s387]
                %401 = vst [vmem:[%s395 + $0x20] sm:%s387] %v400
              $region57: #{tpu_custom_call.1} parent=51 // loop_footer
                %s393 = sadd.s32 1, %s389
              $region58: #{tpu_custom_call.1} parent=51 // loop_footer_branch
                %388 = sbr.rel target = $region54
              $region59: #{tpu_custom_call.1} parent=51 // loop_exit
                _
            $region52: #{tpu_custom_call.1} parent=43 // pred_fallthru
              _
          $region44: #{tpu_custom_call.1} parent=39 // pred_fallthru
            _
          %420 = vnop
        $region40: #{tpu_custom_call.1} parent=35 // pred_fallthru
          _
      $region36: #{tpu_custom_call.1} parent=5 // pred_fallthru
        _
      %p421 = scmp.le.s32.totalorder 2, %s10
      // Predicated region
      $region75: #{tpu_custom_call.1} parent=5 // pred_check
        %p422 = pneg %p421
      $region76: #{tpu_custom_call.1} parent=5 // pred_check_branch
        %424 = sbr.rel (%p422) target = $region78
      $region77: #{tpu_custom_call.1} parent=5 // pred_region
        %s425 = ssub.s32 %s10, 2
        // Predicated region
        $region79: #{tpu_custom_call.1} parent=77 // pred_check
          %p426 = pneg %p144
        $region80: #{tpu_custom_call.1} parent=77 // pred_check_branch
          %428 = sbr.rel (%p426) target = $region82
        $region81: #{tpu_custom_call.1} parent=77 // pred_region
          %s429 = sand.u32 %s129, 1
          %s430 = sand.u32 %s129, 1
          %s431 = smul.addr %s430, 24
          %s432 = scalar_lea.vmem [#allocation2], %s431
        $region82: #{tpu_custom_call.1} parent=77 // pred_fallthru
          _
      $region78: #{tpu_custom_call.1} parent=5 // pred_fallthru
        _
    $region6: #{tpu_custom_call.1} parent=1 // loop_footer
      %s14 = sadd.s32 1, %s10
    $region7: #{tpu_custom_call.1} parent=1 // loop_footer_branch
      %9 = sbr.rel target = $region3
    $region8: #{tpu_custom_call.1} parent=1 // loop_exit
      _

</llo_original>
